<compile_context>
chip_gen: v7x
topology: tpu7x:2x2x1
jax: 0.10.0
libtpu: 0.0.40
codegen_flags: <defaults>
</compile_context>

<pallas_src>
import jax
import jax.numpy as jnp
from jax.experimental import pallas as pl
from jax.experimental.pallas import tpu as pltpu

EPS = 1e-10


def _l2norm_kernel(x_ref, w_ref, o_ref):
    """Normalize over axis=1 (channels) and scale by the per-channel weight.

    Works for both wrapper layouts:
      3D block (Nb, C, T)       - C on sublanes, lane-dense spatial tile T
      4D block (Nb, C, S, 128)  - dense last-two dims when C is tiny
    """
    x = x_ref[...]
    xf = x.astype(jnp.float32)
    ssq = jnp.sum(xf * xf, axis=1, keepdims=True)   # per batch-row channel reduce
    norm = jnp.sqrt(ssq) + EPS                      # f32, matches reference eps placement

    if jnp.dtype(o_ref.dtype) == jnp.dtype(jnp.bfloat16):
        # bf16 I/O: reduction stays f32, scale multiplies stay bf16 (v6e/v7x VPU
        # is bf16-capable); approx reciprocal (EUP slot) is free precision-wise
        # once cast to bf16.
        inv = pl.reciprocal(norm, approx=True).astype(jnp.bfloat16)
        o_ref[...] = (x * inv) * w_ref[...].astype(jnp.bfloat16)
    else:
        # f32 path: exact reciprocal keeps ~1e-5 parity with the reference; the
        # kernel is HBM-bound so the Newton refinement is hidden.
        inv = pl.reciprocal(norm, approx=False)
        o_ref[...] = ((xf * inv) * w_ref[...].astype(jnp.float32)).astype(o_ref.dtype)


def _vmem_budget():
    """(block-size target, full-extent threshold, vmem_limit cap) per generation.

    Conservative (v7x: 64 MiB per TC) unless a 128-MiB part is visible."""
    try:
        cap = int(pltpu.get_tpu_info().vmem_capacity_bytes)
    except Exception:
        cap = 64 << 20
    if cap >= (96 << 20):                      # v5e / v6e: 128 MiB physical VMEM
        return 4 << 20, 6 << 20, 56 << 20
    return 2 << 20, 4 << 20, 36 << 20          # v7x (or unknown): stay small


def _pick_nb(n: int, slab_bytes: int, target_bytes: int) -> int:
    """Images per block when the whole spatial extent is a single tile."""
    nb = max(1, min(n, target_bytes // max(1, slab_bytes)))
    if nb >= n and n >= 2:
        nb = pl.cdiv(n, 2)          # keep >= 2 batch steps so both v7x TCs get work
    nb = pl.cdiv(n, pl.cdiv(n, nb))  # even the batch blocks out (avoid ragged last block)
    return nb


def l2norm(x_nchw: jax.Array, weight: jax.Array) -> jax.Array:
    """Channel-wise L2 normalization followed by per-channel scaling.

    x_nchw : (N, C, H, W);  weight : (C,);  returns (N, C, H, W), same dtype as x.
    """
    N, C, H, W = x_nchw.shape
    HW = H * W
    itemsize = jnp.dtype(x_nchw.dtype).itemsize
    target_bytes, full_max_bytes, vmem_cap = _vmem_budget()

    slab = C * HW * itemsize                        # bytes of one image
    pack = {4: 8, 2: 16, 1: 32}.get(itemsize, 8)    # sublane packing for this dtype
    use_dense_c = (HW % 128 == 0) and (C % pack != 0)

    if use_dense_c:
        # ---- (N, C, S, 128): last two dims fully dense; reduce over non-minor C ----
        S = HW // 128
        x_v = x_nchw.reshape(N, C, S, 128)
        w_v = weight.reshape(1, C, 1, 1)
        if slab <= full_max_bytes:
            s_tile = S                              # full extent, always legal
            nb = _pick_nb(N, slab, target_bytes)
        else:
            nb = 1
            row_bytes = C * 128 * itemsize
            s_tile = max(8, (target_bytes // max(1, row_bytes)) // 8 * 8)
            s_tile = S if s_tile >= S else s_tile
        if N == 1 and s_tile == S and S >= 16 and slab >= (1 << 20):
            s_tile = pl.cdiv(pl.cdiv(S, 2), 8) * 8  # split so v7x's 2nd TC gets work
        grid = (pl.cdiv(N, nb), pl.cdiv(S, s_tile))
        block = (nb, C, s_tile, 128)
        idx = lambda n, j: (n, 0, j, 0)
        w_spec = pl.BlockSpec((1, C, 1, 1), lambda n, j: (0, 0, 0, 0))
        block_bytes = nb * C * s_tile * 128 * itemsize
        out_shape = jax.ShapeDtypeStruct((N, C, S, 128), x_nchw.dtype)
    else:
        # ---- (N, C, HW): C on sublanes, lane-dense spatial tile ----
        x_v = x_nchw.reshape(N, C, HW)
        w_v = weight.reshape(1, C, 1)
        if slab <= full_max_bytes:
            tile_hw = HW                            # full extent: legal for any HW, no ragged tail
            nb = _pick_nb(N, slab, target_bytes)
        else:
            nb = 1
            t = max(128, (target_bytes // max(1, C * itemsize)) // 128 * 128)
            if t >= HW:
                t = HW
            elif HW % 128 == 0:
                # even out: every block (incl. the tail) is a multiple of 128 lanes
                t = pl.cdiv(HW // 128, pl.cdiv(HW, t)) * 128
            tile_hw = t
        if N == 1 and tile_hw == HW and HW % 128 == 0 and HW >= 256 and slab >= (1 << 20):
            tile_hw = pl.cdiv(HW // 128, 2) * 128   # split so v7x's 2nd TC gets work
        grid = (pl.cdiv(N, nb), pl.cdiv(HW, tile_hw))
        block = (nb, C, tile_hw)
        idx = lambda n, j: (n, 0, j)
        w_spec = pl.BlockSpec((1, C, 1), lambda n, j: (0, 0, 0))
        block_bytes = nb * C * tile_hw * itemsize
        out_shape = jax.ShapeDtypeStruct((N, C, HW), x_nchw.dtype)

    # Double-buffered in + out blocks plus f32 in-kernel intermediates, with headroom;
    # clamped per generation (v7x: 64 MiB/TC physical; also lifts v5e's 16 MiB default).
    f32_block = 4 * (block_bytes // itemsize)
    vmem_limit = int(min(max(4 * block_bytes + 2 * f32_block + (2 << 20), 16 << 20), vmem_cap))

    out = pl.pallas_call(
        _l2norm_kernel,
        out_shape=out_shape,
        grid_spec=pltpu.PrefetchScalarGridSpec(
            num_scalar_prefetch=0,
            grid=grid,
            in_specs=[pl.BlockSpec(block, idx), w_spec],
            out_specs=pl.BlockSpec(block, idx),
        ),
        compiler_params=pltpu.CompilerParams(
            dimension_semantics=("parallel", "parallel"),
            vmem_limit_bytes=vmem_limit,
        ),
    )(x_v, w_v)

    return out.reshape(N, C, H, W)


def l2norm_reference(x_nchw: jax.Array, weight: jax.Array) -> jax.Array:
    """Pure-JAX reference matching the PyTorch forward."""
    xf = x_nchw.astype(jnp.float32)
    norm = jnp.sqrt(jnp.sum(xf * xf, axis=1, keepdims=True)) + EPS
    out = weight.astype(jnp.float32).reshape(1, -1, 1, 1) * (xf / norm)
    return out.astype(x_nchw.dtype)


if __name__ == "__main__":
    SCALE = 20.0  # L2Norm.reset_parameters: weight initialized to `scale`
    key = jax.random.PRNGKey(0)
    k1, k2, k3 = jax.random.split(key, 3)

    # Case 1: harness shape (C=4 -> dense small-C layout), f32, exact-reciprocal path.
    x1 = jax.random.normal(k1, (2, 4, 16, 16), dtype=jnp.float32)
    w1 = jnp.full((4,), SCALE, dtype=jnp.float32)
    o1 = jax.block_until_ready(l2norm(x1, w1))
    assert o1.shape == x1.shape and o1.dtype == x1.dtype
    assert jnp.allclose(o1, l2norm_reference(x1, w1), atol=1e-5, rtol=1e-5)

    # Case 2: sublane-channel layout path (C multiple of 8, HW not a multiple of 128).
    x2 = jax.random.normal(k2, (2, 8, 19, 19), dtype=jnp.float32)
    w2 = jnp.full((8,), SCALE, dtype=jnp.float32)
    o2 = jax.block_until_ready(l2norm(x2, w2))
    assert jnp.allclose(o2, l2norm_reference(x2, w2), atol=1e-5, rtol=1e-5)

    # Case 3: bf16 I/O path (f32 sum-of-squares, bf16 scale multiplies, approx reciprocal).
    x3 = jax.random.normal(k3, (2, 4, 16, 16), dtype=jnp.bfloat16)
    w3 = jnp.full((4,), SCALE, dtype=jnp.bfloat16)
    o3 = jax.block_until_ready(l2norm(x3, w3))
    assert o3.dtype == jnp.bfloat16
    assert jnp.allclose(o3.astype(jnp.float32),
                        l2norm_reference(x3, w3).astype(jnp.float32),
                        atol=2e-2, rtol=2e-2)

    print("KERNEL_OK")
</pallas_src>

<mosaic_0001>
module attributes {stable_mosaic.version = 11 : i64} {
  func.func @_l2norm_kernel(%arg0: i32, %arg1: i32, %arg2: memref<1x4x2x128xf32, #tpu.memory_space<vmem>>, %arg3: memref<1x4x1x1xf32, #tpu.memory_space<vmem>>, %arg4: memref<1x4x2x128xf32, #tpu.memory_space<vmem>>) attributes {dimension_semantics = [#tpu.dimension_semantics<parallel>, #tpu.dimension_semantics<parallel>], iteration_bounds = array<i64: 2, 1>, scalar_prefetch = 0 : i64, scratch_operands = 0 : i64, tpu.core_type = #tpu.core_type<tc>, window_params = [{transform_indices = @transform_0, window_bounds = array<i64: 1, 4, 2, 128>}, {pipeline_mode = #tpu.pipeline_mode<synchronous>, transform_indices = @transform_1, window_bounds = array<i64: 1, 4, 1, 1>}, {transform_indices = @transform_2, window_bounds = array<i64: 1, 4, 2, 128>}]} {
    %c0 = arith.constant 0 : index
    %c0_0 = arith.constant 0 : index
    %c0_1 = arith.constant 0 : index
    %c0_2 = arith.constant 0 : index
    %0 = vector.load %arg2[%c0, %c0_0, %c0_1, %c0_2] : memref<1x4x2x128xf32, #tpu.memory_space<vmem>>, vector<1x4x2x128xf32>
    %1 = arith.mulf %0, %0 : vector<1x4x2x128xf32>
    %cst = arith.constant dense<0.000000e+00> : vector<1x2x128xf32>
    %2 = vector.multi_reduction <add>, %1, %cst [1] : vector<1x4x2x128xf32> to vector<1x2x128xf32>
    %3 = vector.shape_cast %2 : vector<1x2x128xf32> to vector<1x1x2x128xf32>
    %4 = math.sqrt %3 : vector<1x1x2x128xf32>
    %cst_3 = arith.constant 1.000000e-10 : f32
    %5 = vector.broadcast %cst_3 : f32 to vector<1x1x2x128xf32>
    %6 = arith.addf %4, %5 : vector<1x1x2x128xf32>
    %7 = tpu.reciprocal %6 : vector<1x1x2x128xf32> -> vector<1x1x2x128xf32>
    %8 = vector.broadcast %7 : vector<1x1x2x128xf32> to vector<1x4x2x128xf32>
    %9 = arith.mulf %0, %8 : vector<1x4x2x128xf32>
    %c0_4 = arith.constant 0 : index
    %c0_5 = arith.constant 0 : index
    %c0_6 = arith.constant 0 : index
    %c0_7 = arith.constant 0 : index
    %10 = vector.load %arg3[%c0_4, %c0_5, %c0_6, %c0_7] : memref<1x4x1x1xf32, #tpu.memory_space<vmem>>, vector<1x4x1x1xf32>
    %11 = vector.broadcast %10 : vector<1x4x1x1xf32> to vector<1x4x2x128xf32>
    %12 = arith.mulf %9, %11 : vector<1x4x2x128xf32>
    %c0_8 = arith.constant 0 : index
    %c0_9 = arith.constant 0 : index
    %c0_10 = arith.constant 0 : index
    %c0_11 = arith.constant 0 : index
    %13 = vector.load %arg4[%c0_8, %c0_9, %c0_10, %c0_11] : memref<1x4x2x128xf32, #tpu.memory_space<vmem>>, vector<1x4x2x128xf32>
    tpu.vector_store %arg4[%c0_8, %c0_9, %c0_10, %c0_11], %12 {strides = array<i32>} : memref<1x4x2x128xf32, #tpu.memory_space<vmem>>, vector<1x4x2x128xf32>,
    return
  }
  func.func @transform_0(%arg0: i32, %arg1: i32) -> (i32, i32, i32, i32) {
    %c0_i32 = arith.constant 0 : i32
    %c0_i32_0 = arith.constant 0 : i32
    %c0_i32_1 = arith.constant 0 : i32
    return %arg0, %c0_i32, %arg1, %c0_i32_0 : i32, i32, i32, i32
  }
  func.func @transform_1(%arg0: i32, %arg1: i32) -> (i32, i32, i32, i32) {
    %c0_i32 = arith.constant 0 : i32
    %c0_i32_0 = arith.constant 0 : i32
    %c0_i32_1 = arith.constant 0 : i32
    %c0_i32_2 = arith.constant 0 : i32
    %c0_i32_3 = arith.constant 0 : i32
    return %c0_i32, %c0_i32_0, %c0_i32_1, %c0_i32_2 : i32, i32, i32, i32
  }
  func.func @transform_2(%arg0: i32, %arg1: i32) -> (i32, i32, i32, i32) {
    %c0_i32 = arith.constant 0 : i32
    %c0_i32_0 = arith.constant 0 : i32
    %c0_i32_1 = arith.constant 0 : i32
    return %arg0, %c0_i32, %arg1, %c0_i32_0 : i32, i32, i32, i32
  }
}

</mosaic_0001>

<llo_original>
// kernel: tpu_custom_call.1
$region0: #{tpu_custom_call.1}
  #allocation0 [shape = 'u32[]', space=smem, size = 0x4, offset = 0x4, fixed_abs, tag = 'smem constant byte address 0x4 - core index']
  #allocation1 [shape = 'u32[144,128]{1,0:T(1,128)}', space=vmem, size = 0x12000, scoped, tag = 'internal scratch']
  %s0 = inlined_call_operand.hbm [shape: f32[2,4,2,128], index: 0, kind: input, shape index: {}]
  %s1 = inlined_call_operand.vmem [shape: f32[1,4,1,1], index: 1, kind: input, shape index: {}]
  %s2 = inlined_call_operand.hbm [shape: f32[2,4,2,128], index: 2, kind: output, shape index: {}]
  %s3 = sld [smem:[#allocation0]]
  $region45: #{tpu_custom_call.1} parent=0
    _
  %s5 = ssub.s32 1, %s3
  %s6 = scalar_select 0, %s5, %s3
  $region1: #{tpu_custom_call.1} parent=0
    #allocation2 [shape = 'u8[8192]{0}', space=vmem, size = 0x2000, scoped, tag = 'input window, operand 0']
    #allocation3 [shape = 's32[2]{0}', space=sflag, size = 0x8, scoped, tag = 'scoped memory for tpu_custom_call.1']
    #allocation4 [shape = 's32[2]{0}', space=sflag, size = 0x8, scoped, tag = 'scoped memory for tpu_custom_call.1']
    #allocation5 [shape = 'u8[8192]{0}', space=vmem, size = 0x2000, scoped, tag = 'output window, operand 0']
    %7 = vsyncpa [#allocation3], 0
    %s8 = scalar_lea.sflag [#allocation3], 1
    %9 = vsyncpa %s8, 0
    %10 = vsyncpa [#allocation4], 0
    %s11 = scalar_lea.sflag [#allocation4], 1
    %12 = vsyncpa %s11, 0
    loop: start=0, step=1, limit=4
    $region2: #{tpu_custom_call.1} parent=1 // loop_pre_header
      _
    $region3: #{tpu_custom_call.1} parent=1 // loop_header
      %s14 = sphi 0, %s18
      %p15 = scmp.ge.s32.totalorder %s14, 4
      %s21 = sphi 0, %s33
      %s22 = sphi 0, %s29
      %s23 = sphi 0, %s21
      %s24 = sphi 0, %s22
      %s25 = sphi 0, %s23
      %s26 = sphi 0, %s24
      %s38 = sphi 0, %s40
      %s41 = sphi 0, %s38
      %s42 = sphi 0, %s41
      %s58 = sphi 0, %s42
      %s62 = sphi 0, %s62
      %s64 = sphi 0, %s62
      %s65 = sphi 0, %s64
      %s79 = sphi 0, %s65
      %s87 = sphi 0, %s89
      %s90 = sphi 0, %s87
      %s91 = sphi 0, %s90
      %s107 = sphi 0, %s91
    $region4: #{tpu_custom_call.1} parent=1 // loop_header_branch
      %17 = sbr.rel (%p15) target = $region8
    $region5: #{tpu_custom_call.1} parent=1 // loop_body
      %s19 = ssub.s32 %s14, 1
      %s20 = ssub.s32 %s14, 2
      %s27 = sadd.s32 1, %s22
      %p28 = scmp.ge.s32.totalorder %s27, 1
      %s29 = scalar_select %p28, 0, %s27
      %s30 = sadd.s32 1, %s21
      %s31 = scalar_select %p28, %s30, %s21
      %p32 = scmp.ge.s32.totalorder %s31, 2
      %s33 = scalar_select %p32, 0, %s31
      %s34 = ssub.s32 %s21, %s33
      %s35 = ssub.s32 %s22, %s29
      %s36 = sor.u32 %s34, %s35
      %p37 = scmp.eq.s32.totalorder %s36, 0
      %s39 = sadd.s32 %s38, 1
      %s40 = scalar_select %p37, %s38, %s39
      %p43 = pneg %p37
      %p44 = scmp.eq.s32.totalorder %s14, 1
      %p45 = por %p43, %p44
      %p46 = scmp.ne.s32.totalorder %s38, %s41
      %p47 = scmp.eq.s32.totalorder %s14, 0
      %p48 = por %p46, %p47
      %p49 = scmp.ne.s32.totalorder %s38, %s41
      %p50 = scmp.eq.s32.totalorder %s19, 1
      %p51 = por %p49, %p50
      %p52 = scmp.ne.s32.totalorder %s41, %s42
      %p53 = scmp.eq.s32.totalorder %s19, 0
      %p54 = por %p52, %p53
      %p55 = scmp.ne.s32.totalorder %s41, %s42
      %p56 = scmp.eq.s32.totalorder %s20, 1
      %p57 = por %p55, %p56
      %p59 = scmp.ne.s32.totalorder %s42, %s58
      %p60 = scmp.eq.s32.totalorder %s20, 0
      %p61 = por %p59, %p60
      %s63 = sadd.s32 %s62, 1
      %p66 = scmp.eq.s32.totalorder %s14, 1
      %p67 = scmp.ne.s32.totalorder %s62, %s64
      %p68 = scmp.eq.s32.totalorder %s14, 0
      %p69 = por %p67, %p68
      %p70 = scmp.ne.s32.totalorder %s62, %s64
      %p71 = scmp.eq.s32.totalorder %s19, 1
      %p72 = por %p70, %p71
      %p73 = scmp.ne.s32.totalorder %s64, %s65
      %p74 = scmp.eq.s32.totalorder %s19, 0
      %p75 = por %p73, %p74
      %p76 = scmp.ne.s32.totalorder %s64, %s65
      %p77 = scmp.eq.s32.totalorder %s20, 1
      %p78 = por %p76, %p77
      %p80 = scmp.ne.s32.totalorder %s65, %s79
      %p81 = scmp.eq.s32.totalorder %s20, 0
      %p82 = por %p80, %p81
      %s83 = ssub.s32 %s21, %s33
      %s84 = ssub.s32 %s22, %s29
      %s85 = sor.u32 %s83, %s84
      %p86 = scmp.eq.s32.totalorder %s85, 0
      %s88 = sadd.s32 %s87, 1
      %s89 = scalar_select %p86, %s87, %s88
      %p92 = pneg %p86
      %p93 = scmp.eq.s32.totalorder %s14, 1
      %p94 = por %p92, %p93
      %p95 = scmp.ne.s32.totalorder %s87, %s90
      %p96 = scmp.eq.s32.totalorder %s14, 0
      %p97 = por %p95, %p96
      %p98 = scmp.ne.s32.totalorder %s87, %s90
      %p99 = scmp.eq.s32.totalorder %s19, 1
      %p100 = por %p98, %p99
      %p101 = scmp.ne.s32.totalorder %s90, %s91
      %p102 = scmp.eq.s32.totalorder %s19, 0
      %p103 = por %p101, %p102
      %p104 = scmp.ne.s32.totalorder %s90, %s91
      %p105 = scmp.eq.s32.totalorder %s20, 1
      %p106 = por %p104, %p105
      %p108 = scmp.ne.s32.totalorder %s91, %s107
      %p109 = scmp.eq.s32.totalorder %s20, 0
      %p110 = por %p108, %p109
      %p111 = scmp.le.s32.totalorder 1, %s14
      %p112 = scmp.lt.s32.totalorder %s14, 3
      %p113 = pnand %p111, %p112
      %p114 = pneg %p113
      // Predicated region
      $region9: #{tpu_custom_call.1} parent=5 // pred_check
        _
      $region10: #{tpu_custom_call.1} parent=5 // pred_check_branch
        %116 = sbr.rel (%p113) target = $region12
      $region11: #{tpu_custom_call.1} parent=5 // pred_region
        %s117 = ssub.s32 %s14, 1
        // Predicated region
        $region13: #{tpu_custom_call.1} parent=11 // pred_check
          %p118 = pneg %p75
        $region14: #{tpu_custom_call.1} parent=11 // pred_check_branch
          %120 = sbr.rel (%p118) target = $region16
        $region15: #{tpu_custom_call.1} parent=11 // pred_region
          _
        $region16: #{tpu_custom_call.1} parent=11 // pred_fallthru
          _
      $region12: #{tpu_custom_call.1} parent=5 // pred_fallthru
        _
      %p121 = scmp.lt.s32.totalorder %s14, 2
      // Predicated region
      $region17: #{tpu_custom_call.1} parent=5 // pred_check
        %p122 = pneg %p121
      $region18: #{tpu_custom_call.1} parent=5 // pred_check_branch
        %124 = sbr.rel (%p122) target = $region20
      $region19: #{tpu_custom_call.1} parent=5 // pred_region
        // Predicated region
        $region21: #{tpu_custom_call.1} parent=19 // pred_check
          %p125 = pneg %p48
        $region22: #{tpu_custom_call.1} parent=19 // pred_check_branch
          %127 = sbr.rel (%p125) target = $region24
        $region23: #{tpu_custom_call.1} parent=19 // pred_region
          %s128 = sand.u32 %s38, 1
          %s129 = scalar_lea.sflag [#allocation3], %s128
          %s130 = sand.u32 %s38, 1
          %s131 = smul.addr %s130, 8
          %s132 = scalar_lea.vmem [#allocation2], %s131
          %s134 = ssub.s32 128, 128
          %135 = vsyncadd %s129, %s134
          %s136 = smul.addr %s21, 4
          %s137 = sadd.s32 %s22, %s136
          %s138 = smul.addr %s137, 32
          %s139 = scalar_lea.hbm %s0, %s138
          %s140 = sshll.u32 %s132, 4
          %s141 = int_to_ptr.vmem [resolvable:$true] %s140
          %146 = dma.hbm_to_vmem [thread:$0]  %s139, 128, %s141, %s129, 32, 32, 2
        $region24: #{tpu_custom_call.1} parent=19 // pred_fallthru
          _
      $region20: #{tpu_custom_call.1} parent=5 // pred_fallthru
        _
      %p147 = scmp.le.s32.totalorder 1, %s14
      %p148 = scmp.lt.s32.totalorder %s14, 3
      %p149 = pnand %p147, %p148
      %p150 = pneg %p149
      // Predicated region
      $region25: #{tpu_custom_call.1} parent=5 // pred_check
        _
      $region26: #{tpu_custom_call.1} parent=5 // pred_check_branch
        %152 = sbr.rel (%p149) target = $region28
      $region27: #{tpu_custom_call.1} parent=5 // pred_region
        %s153 = ssub.s32 %s14, 1
        %s154 = sand.u32 %s41, 1
        %s155 = scalar_lea.sflag [#allocation3], %s154
        %s156 = sand.u32 %s41, 1
        %s157 = smul.addr %s156, 8
        %s158 = scalar_lea.vmem [#allocation2], %s157
        // Predicated region
        $region29: #{tpu_custom_call.1} parent=27 // pred_check
          %p159 = pneg %p54
        $region30: #{tpu_custom_call.1} parent=27 // pred_check_branch
          %161 = sbr.rel (%p159) target = $region32
        $region31: #{tpu_custom_call.1} parent=27 // pred_region
          %162 = dma.done %s155, 128
        $region32: #{tpu_custom_call.1} parent=27 // pred_fallthru
          _
        %s163 = sand.u32 %s41, 1
        %s164 = scalar_lea.sflag [#allocation3], %s163
        %s165 = sand.u32 %s41, 1
        %s166 = smul.addr %s165, 8
        %s167 = scalar_lea.vmem [#allocation2], %s166
        %p168 = pneg %p54
        %p169 = pneg %p51
        %p170 = pneg %p75
        %p171 = pneg %p72
        %p172 = pneg %p103
        %p173 = pneg %p100
        %s174 = sand.u32 %s90, 1
        %s175 = scalar_lea.sflag [#allocation4], %s174
        %s176 = sand.u32 %s90, 1
        %s177 = smul.addr %s176, 8
        %s178 = scalar_lea.vmem [#allocation5], %s177
        %v179 = vld [vmem:[%s158] sm:$0x3]
        %v180 = vld [vmem:[%s158 + $0x2] sm:$0x3]
        %v181 = vld [vmem:[%s158 + $0x4] sm:$0x3]
        %v182 = vld [vmem:[%s158 + $0x6] sm:$0x3]
        %v183 = vmul.f32 %v179, %v179
        %v184 = vmul.f32 %v180, %v180
        %v185 = vmul.f32 %v181, %v181
        %v186 = vmul.f32 %v182, %v182
        %vm187 = vcmask 1041408
        %v188 = vsel %vm187, %v183, 0.0
        %v189 = vsel %vm187, %v184, 0.0
        %v190 = vadd.f32 %v188, %v189
        %v191 = vsel %vm187, %v185, 0.0
        %v192 = vadd.f32 %v190, %v191
        %v193 = vsel %vm187, %v186, 0.0
        %v194 = vadd.f32 %v192, %v193
        %v195 = vrsqrt.pop %v194
        %v196 = vmul.f32 %v194, %v195
        %vm197 = vcmp.eq.f32.partialorder %v194, inf
        %v198 = vsel %vm197, %v194, %v196
        %vm199 = vcmp.eq.f32.partialorder %v194, 0.0
        %v200 = vand.u32 %v194, 2147483648
        %v201 = vsel %vm199, %v200, %v198
        %v202 = vadd.f32 %v201, 1e-10
        %v203 = vrcp.pop %v202
        %v204 = vmul.f32 %v179, %v203
        %v205 = vmul.f32 %v180, %v203
        %v206 = vmul.f32 %v181, %v203
        %v207 = vmul.f32 %v182, %v203
        %v208 = vld [vmem:[%s1] sm:$0x1]
        %v209 = vld [vmem:[%s1 + $0x1] sm:$0x1]
        %v210 = vld [vmem:[%s1 + $0x2] sm:$0x1]
        %v211 = vld [vmem:[%s1 + $0x3] sm:$0x1]
        %v216 = vlaneseq
        %v217 = vshrl.u32 %v216, 7
        %v218 = vsub.s32 0, %v217
        %v219 = vrot.slane %v208, %v218
        %v220 = vlaneseq
        %v221 = vshrl.u32 %v220, 7
        %v222 = vsub.s32 0, %v221
        %v223 = vrot.slane %v209, %v222
        %v224 = vlaneseq
        %v225 = vshrl.u32 %v224, 7
        %v226 = vsub.s32 0, %v225
        %v227 = vrot.slane %v210, %v226
        %v228 = vlaneseq
        %v229 = vshrl.u32 %v228, 7
        %v230 = vsub.s32 0, %v229
        %v231 = vrot.slane %v211, %v230
        %232 = vset.pattern.permute.xlu0 0
        %233 = vperm.xlu0 %232, %v219
        %v234 = vpop.permute.xlu0 %233
        %236 = vset.pattern.permute.xlu0 0
        %237 = vperm.xlu0 %236, %v223
        %v238 = vpop.permute.xlu0 %237
        %240 = vset.pattern.permute.xlu0 0
        %241 = vperm.xlu0 %240, %v227
        %v242 = vpop.permute.xlu0 %241
        %244 = vset.pattern.permute.xlu0 0
        %245 = vperm.xlu0 %244, %v231
        %v246 = vpop.permute.xlu0 %245
        %v248 = vmul.f32 %v204, %v234
        %v249 = vmul.f32 %v205, %v238
        %v250 = vmul.f32 %v206, %v242
        %v251 = vmul.f32 %v207, %v246
        %252 = vst [vmem:[%s178] sm:$0x3] %v248
        %253 = vst [vmem:[%s178 + $0x2] sm:$0x3] %v249
        %254 = vst [vmem:[%s178 + $0x4] sm:$0x3] %v250
        %255 = vst [vmem:[%s178 + $0x6] sm:$0x3] %v251
        %s256 = sand.u32 %s90, 1
        %s257 = scalar_lea.sflag [#allocation4], %s256
        %s258 = sand.u32 %s90, 1
        %s259 = smul.addr %s258, 8
        %s260 = scalar_lea.vmem [#allocation5], %s259
        // Predicated region
        $region33: #{tpu_custom_call.1} parent=27 // pred_check
          %p261 = pneg %p100
        $region34: #{tpu_custom_call.1} parent=27 // pred_check_branch
          %263 = sbr.rel (%p261) target = $region36
        $region35: #{tpu_custom_call.1} parent=27 // pred_region
          %s265 = ssub.s32 128, 128
          %266 = vsyncadd %s257, %s265
          %s267 = smul.addr %s23, 4
          %s268 = sadd.s32 %s24, %s267
          %s269 = smul.addr %s268, 32
          %s270 = scalar_lea.hbm %s2, %s269
          %s271 = sshll.u32 %s260, 4
          %s272 = int_to_ptr.vmem [resolvable:$true] %s271
          %277 = dma.vmem_to_hbm [thread:$0]  %s272, 128, %s270, %s257, 32, 32, 2
        $region36: #{tpu_custom_call.1} parent=27 // pred_fallthru
          _
      $region28: #{tpu_custom_call.1} parent=5 // pred_fallthru
        _
      %p278 = scmp.le.s32.totalorder 2, %s14
      // Predicated region
      $region37: #{tpu_custom_call.1} parent=5 // pred_check
        %p279 = pneg %p278
      $region38: #{tpu_custom_call.1} parent=5 // pred_check_branch
        %281 = sbr.rel (%p279) target = $region40
      $region39: #{tpu_custom_call.1} parent=5 // pred_region
        %s282 = ssub.s32 %s14, 2
        // Predicated region
        $region41: #{tpu_custom_call.1} parent=39 // pred_check
          %p283 = pneg %p106
        $region42: #{tpu_custom_call.1} parent=39 // pred_check_branch
          %285 = sbr.rel (%p283) target = $region44
        $region43: #{tpu_custom_call.1} parent=39 // pred_region
          %s286 = sand.u32 %s91, 1
          %s287 = scalar_lea.sflag [#allocation4], %s286
          %s288 = sand.u32 %s91, 1
          %s289 = smul.addr %s288, 8
          %s290 = scalar_lea.vmem [#allocation5], %s289
          %291 = dma.done %s287, 128
        $region44: #{tpu_custom_call.1} parent=39 // pred_fallthru
          _
      $region40: #{tpu_custom_call.1} parent=5 // pred_fallthru
        _
    $region6: #{tpu_custom_call.1} parent=1 // loop_footer
      %s18 = sadd.s32 1, %s14
    $region7: #{tpu_custom_call.1} parent=1 // loop_footer_branch
      %13 = sbr.rel target = $region3
    $region8: #{tpu_custom_call.1} parent=1 // loop_exit
      _
    %292 = vsyncpa [#allocation3], 1
    %s293 = scalar_lea.sflag [#allocation3], 1
    %294 = vsyncpa %s293, 1
    %295 = vsyncpa [#allocation4], 1
    %s296 = scalar_lea.sflag [#allocation4], 1
    %297 = vsyncpa %s296, 1

</llo_original>
